<compile_context>
chip_gen: v5e
topology: v5e:2x2
jax: 0.10.0
libtpu: 0.0.40
codegen_flags: <defaults>
</compile_context>

<pallas_src>
import jax
import jax.numpy as jnp
from jax import lax
from jax.experimental import pallas as pl
from jax.experimental.pallas import tpu as pltpu

_CHUNK = 512          # lanes per inner compute chunk (multiple of 128)
_MAX_T = 16384        # max spatial tile (multiple of _CHUNK)


def sag_kernel(x_ref, w_ref, b1_ref, w2_ref, b2_ref, o_ref):
    # x_ref : (Nb, P*C, T)  packed batch rows; channels on sublanes, spatial on lanes
    # w_ref : (P*R, P*C)    block-diagonal fc1 weight (resident)
    # b1_ref: (P*R, 1)      fc1 bias (tiled per group)
    # w2_ref: (P*R, 1)      fc2 weight (tiled per group)
    # b2_ref: (1, 1)        fc2 bias scalar (SMEM)
    # o_ref : (Nb, P, T)    lane-dense output tile
    nb, gc, t = x_ref.shape
    p = o_ref.shape[1]
    gr = w_ref.shape[0]
    r = gr // p

    w = w_ref[...]
    b1 = b1_ref[...]
    w2 = w2_ref[...]
    b2 = b2_ref[0, 0]

    chunk = min(_CHUNK, t)         # static
    n_chunks = t // chunk          # static
    rem = t - n_chunks * chunk     # static tail (only when t == HW and HW % chunk != 0)

    def gate(xc):
        # fc1 as a channel matmul (MXU keeps VPU slots free), ReLU,
        # fc2 as a per-group sublane reduction, sigmoid.
        h = jnp.dot(w, xc, preferred_element_type=jnp.float32)      # (gr, L)
        h = jnp.maximum(h + b1, 0.0)
        y = (w2 * h).reshape(p, r, xc.shape[-1]).sum(axis=1) + b2   # (p, L)
        return jax.nn.sigmoid(y)

    def row(b, carry):
        def chunk_body(ci, c2):
            start = pl.multiple_of(ci * chunk, chunk)
            o_ref[b, :, pl.ds(start, chunk)] = gate(
                x_ref[b, :, pl.ds(start, chunk)]).astype(o_ref.dtype)
            return c2
        lax.fori_loop(0, n_chunks, chunk_body, 0, unroll=n_chunks <= 8)
        if rem:
            start = n_chunks * chunk
            o_ref[b, :, pl.ds(start, rem)] = gate(
                x_ref[b, :, pl.ds(start, rem)]).astype(o_ref.dtype)
        return carry

    lax.fori_loop(0, nb, row, 0, unroll=nb <= 2)


def spatial_attention_gate(x_nchw, w1_rc, b1, w2_r, b2, *,
                           target_block_bytes=2 * 1024 * 1024):
    """x_nchw: (N, C, H, W) f32.  w1_rc: (R, C), b1: (R,), w2_r: (R,), b2: (1,).

    Returns (N, 1, H, W), matching Conv2d(C,R,1) -> ReLU -> Conv2d(R,1,1) -> sigmoid.
    """
    N, C, H, W = x_nchw.shape
    R = w1_rc.shape[0]
    HW = H * W
    itemsize = x_nchw.dtype.itemsize

    # ---- sublane packing: P images share the 8-sublane f32 tile ----
    P = 1
    for cand in (8, 4, 2):
        if N % cand == 0 and cand * C <= 8:
            P = cand
            break
    NP = N // P
    GC, GR = P * C, P * R

    x3 = x_nchw.reshape(NP, GC, HW)          # free view of contiguous NCHW

    if P == 1:
        w_bd = w1_rc
    else:
        w_bd = jnp.zeros((GR, GC), w1_rc.dtype)
        for g in range(P):
            w_bd = w_bd.at[g * R:(g + 1) * R, g * C:(g + 1) * C].set(w1_rc)
    b1_col = jnp.tile(b1.reshape(R, 1), (P, 1))      # (GR, 1)
    w2_col = jnp.tile(w2_r.reshape(R, 1), (P, 1))    # (GR, 1)
    b2_sc = b2.reshape(1, 1)                         # SMEM scalar

    # ---- spatial tile: lane-dense, multiple of 128 (or the full HW) ----
    if HW <= _MAX_T:
        T = HW                      # full dim -> always a legal block, no padding
    else:
        T = _MAX_T                  # multiple of 128/_CHUNK; last block is ragged
    n_sp = pl.cdiv(HW, T)

    # ---- batch block: amortize per-step overhead toward ~1-2 MiB per step ----
    row_bytes = GC * T * itemsize
    Nb = 1
    for cand in range(1, NP + 1):
        if NP % cand == 0 and cand * row_bytes <= target_block_bytes:
            Nb = cand
    # keep >= 2 grid steps when possible (v7x megacore: 2 TensorCores)
    if (NP // Nb) * n_sp < 2:
        for cand in range(Nb, 0, -1):
            if NP % cand == 0 and (NP // cand) * n_sp >= 2:
                Nb = cand
                break

    grid = (NP // Nb, n_sp)

    out = pl.pallas_call(
        sag_kernel,
        out_shape=jax.ShapeDtypeStruct((NP, P, HW), x_nchw.dtype),
        grid_spec=pltpu.PrefetchScalarGridSpec(
            num_scalar_prefetch=0,
            grid=grid,
            in_specs=[
                pl.BlockSpec((Nb, GC, T), lambda b, s: (b, 0, s)),   # x block
                pl.BlockSpec((GR, GC), lambda b, s: (0, 0)),         # fc1 weight
                pl.BlockSpec((GR, 1), lambda b, s: (0, 0)),          # fc1 bias
                pl.BlockSpec((GR, 1), lambda b, s: (0, 0)),          # fc2 weight
                pl.BlockSpec(memory_space=pltpu.MemorySpace.SMEM),   # fc2 bias scalar
            ],
            out_specs=pl.BlockSpec((Nb, P, T), lambda b, s: (b, 0, s)),
        ),
        compiler_params=pltpu.CompilerParams(
            dimension_semantics=("parallel", "parallel"),
            vmem_limit_bytes=32 * 1024 * 1024),
    )(x3, w_bd, b1_col, w2_col, b2_sc)

    # (NP, P, HW) is contiguous in image-major order -> free reshape back to NCHW.
    return out.reshape(N, 1, H, W)


def reference(x_nchw, w1_rc, b1, w2_r, b2):
    # Pure-JAX reference of the PyTorch forward (1x1 convs as einsums).
    h = jnp.einsum("nchw,rc->nrhw", x_nchw, w1_rc) + b1[None, :, None, None]
    h = jnp.maximum(h, 0.0)
    y = jnp.einsum("nrhw,r->nhw", h, w2_r)[:, None, :, :] + b2[None, :, None, None]
    return jax.nn.sigmoid(y)


if __name__ == "__main__":
    # Module config: channel=4, reduction=16 (default).  Input: (2, 4, 16, 16).
    N, C, H, W = 2, 4, 16, 16
    R = 16

    key = jax.random.PRNGKey(0)
    k_x, k_w1, k_b1, k_w2, k_b2 = jax.random.split(key, 5)

    x = jax.random.normal(k_x, (N, C, H, W), dtype=jnp.float32)
    # fc1: Conv2d(C, R, 1) -> weight (R, C, 1, 1); stored here as (R, C)
    w1 = jax.random.normal(k_w1, (R, C), dtype=jnp.float32) * 0.1
    b1 = jax.random.normal(k_b1, (R,), dtype=jnp.float32) * 0.1
    # fc2: Conv2d(R, 1, 1) -> weight (1, R, 1, 1); stored as (R,)
    w2 = jax.random.normal(k_w2, (R,), dtype=jnp.float32) * 0.1
    b2 = jax.random.normal(k_b2, (1,), dtype=jnp.float32) * 0.1

    out = spatial_attention_gate(x, w1, b1, w2, b2)
    out = jax.block_until_ready(out)

    ref = reference(x, w1, b1, w2, b2)
    assert out.shape == (N, 1, H, W), out.shape
    assert jnp.allclose(out, ref, atol=1e-5, rtol=1e-5), "mismatch vs reference"

    print("KERNEL_OK")
</pallas_src>

<mosaic_0001>
module attributes {stable_mosaic.version = 11 : i64} {
  func.func @sag_kernel(%arg0: i32, %arg1: i32, %arg2: memref<1x8x256xf32, #tpu.memory_space<vmem>>, %arg3: memref<32x8xf32, #tpu.memory_space<vmem>>, %arg4: memref<32x1xf32, #tpu.memory_space<vmem>>, %arg5: memref<32x1xf32, #tpu.memory_space<vmem>>, %arg6: memref<1x1xf32, #tpu.memory_space<smem>>, %arg7: memref<1x2x256xf32, #tpu.memory_space<vmem>>) attributes {dimension_semantics = [#tpu.dimension_semantics<parallel>, #tpu.dimension_semantics<parallel>], iteration_bounds = array<i64: 1, 1>, scalar_prefetch = 0 : i64, scratch_operands = 0 : i64, tpu.core_type = #tpu.core_type<tc>, window_params = [{transform_indices = @transform_0, window_bounds = array<i64: 1, 8, 256>}, {pipeline_mode = #tpu.pipeline_mode<synchronous>, transform_indices = @transform_1, window_bounds = array<i64: 32, 8>}, {pipeline_mode = #tpu.pipeline_mode<synchronous>, transform_indices = @transform_2, window_bounds = array<i64: 32, 1>}, {pipeline_mode = #tpu.pipeline_mode<synchronous>, transform_indices = @transform_3, window_bounds = array<i64: 32, 1>}, {transform_indices = @transform_4, window_bounds = array<i64: 1, 1>}, {transform_indices = @transform_5, window_bounds = array<i64: 1, 2, 256>}]} {
    %c0 = arith.constant 0 : index
    %c0_0 = arith.constant 0 : index
    %0 = vector.load %arg3[%c0, %c0_0] : memref<32x8xf32, #tpu.memory_space<vmem>>, vector<32x8xf32>
    %c0_1 = arith.constant 0 : index
    %c0_2 = arith.constant 0 : index
    %1 = vector.load %arg4[%c0_1, %c0_2] : memref<32x1xf32, #tpu.memory_space<vmem>>, vector<32x1xf32>
    %c0_3 = arith.constant 0 : index
    %c0_4 = arith.constant 0 : index
    %2 = vector.load %arg5[%c0_3, %c0_4] : memref<32x1xf32, #tpu.memory_space<vmem>>, vector<32x1xf32>
    %c0_5 = arith.constant 0 : index
    %c0_6 = arith.constant 0 : index
    %3 = memref.load %arg6[%c0_5, %c0_6] : memref<1x1xf32, #tpu.memory_space<smem>>
    %c0_i32 = arith.constant 0 : i32
    %c0_i32_7 = arith.constant 0 : i32
    %c256_i32 = arith.constant 256 : i32
    %4 = arith.muli %c0_i32_7, %c256_i32 : i32
    %5 = tpu.assume_multiple %4, 256 : i32
    %6 = arith.index_cast %c0_i32 : i32 to index
    %c0_8 = arith.constant 0 : index
    %7 = arith.index_cast %5 : i32 to index
    %8 = vector.load %arg2[%6, %c0_8, %7] : memref<1x8x256xf32, #tpu.memory_space<vmem>>, vector<1x8x256xf32>
    %9 = vector.shape_cast %8 : vector<1x8x256xf32> to vector<8x256xf32>
    %cst = arith.constant dense<0.000000e+00> : vector<32x256xf32>
    %10 = tpu.matmul %0, %9, %cst {dimension_numbers = #tpu.dot_dimension_numbers<[1], [0], [0], [1], [0, 0, 1, 1], [], []>} : vector<32x8xf32>, vector<8x256xf32>, vector<32x256xf32> -> vector<32x256xf32>
    %11 = vector.broadcast %1 : vector<32x1xf32> to vector<32x256xf32>
    %12 = arith.addf %10, %11 : vector<32x256xf32>
    %cst_9 = arith.constant 0.000000e+00 : f32
    %13 = vector.broadcast %cst_9 : f32 to vector<32x256xf32>
    %14 = arith.maximumf %12, %13 : vector<32x256xf32>
    %15 = vector.broadcast %2 : vector<32x1xf32> to vector<32x256xf32>
    %16 = arith.mulf %15, %14 : vector<32x256xf32>
    %17 = vector.shape_cast %16 : vector<32x256xf32> to vector<2x16x256xf32>
    %cst_10 = arith.constant dense<0.000000e+00> : vector<2x256xf32>
    %18 = vector.multi_reduction <add>, %17, %cst_10 [1] : vector<2x16x256xf32> to vector<2x256xf32>
    %19 = vector.broadcast %3 : f32 to vector<2x256xf32>
    %20 = arith.addf %18, %19 : vector<2x256xf32>
    %21 = arith.negf %20 : vector<2x256xf32>
    %22 = math.exp %21 : vector<2x256xf32>
    %cst_11 = arith.constant 1.000000e+00 : f32
    %23 = vector.broadcast %cst_11 : f32 to vector<2x256xf32>
    %24 = arith.addf %23, %22 : vector<2x256xf32>
    %25 = arith.divf %23, %24 : vector<2x256xf32>
    %26 = arith.index_cast %c0_i32 : i32 to index
    %c0_12 = arith.constant 0 : index
    %27 = arith.index_cast %5 : i32 to index
    %28 = vector.load %arg7[%26, %c0_12, %27] : memref<1x2x256xf32, #tpu.memory_space<vmem>>, vector<1x2x256xf32>
    %29 = vector.shape_cast %28 : vector<1x2x256xf32> to vector<2x256xf32>
    %30 = vector.shape_cast %25 : vector<2x256xf32> to vector<1x2x256xf32>
    tpu.vector_store %arg7[%26, %c0_12, %27], %30 {strides = array<i32>} : memref<1x2x256xf32, #tpu.memory_space<vmem>>, vector<1x2x256xf32>,
    %c1_i32 = arith.constant 1 : i32
    %c1_i32_13 = arith.constant 1 : i32
    return
  }
  func.func @transform_0(%arg0: i32, %arg1: i32) -> (i32, i32, i32) {
    %c0_i32 = arith.constant 0 : i32
    %c0_i32_0 = arith.constant 0 : i32
    return %arg0, %c0_i32, %arg1 : i32, i32, i32
  }
  func.func @transform_1(%arg0: i32, %arg1: i32) -> (i32, i32) {
    %c0_i32 = arith.constant 0 : i32
    %c0_i32_0 = arith.constant 0 : i32
    %c0_i32_1 = arith.constant 0 : i32
    return %c0_i32, %c0_i32_0 : i32, i32
  }
  func.func @transform_2(%arg0: i32, %arg1: i32) -> (i32, i32) {
    %c0_i32 = arith.constant 0 : i32
    %c0_i32_0 = arith.constant 0 : i32
    %c0_i32_1 = arith.constant 0 : i32
    return %c0_i32, %c0_i32_0 : i32, i32
  }
  func.func @transform_3(%arg0: i32, %arg1: i32) -> (i32, i32) {
    %c0_i32 = arith.constant 0 : i32
    %c0_i32_0 = arith.constant 0 : i32
    %c0_i32_1 = arith.constant 0 : i32
    return %c0_i32, %c0_i32_0 : i32, i32
  }
  func.func @transform_4(%arg0: i32, %arg1: i32) -> (i32, i32) {
    %c0_i32 = arith.constant 0 : i32
    %c0_i32_0 = arith.constant 0 : i32
    %c0_i32_1 = arith.constant 0 : i32
    return %c0_i32, %c0_i32_0 : i32, i32
  }
  func.func @transform_5(%arg0: i32, %arg1: i32) -> (i32, i32, i32) {
    %c0_i32 = arith.constant 0 : i32
    %c0_i32_0 = arith.constant 0 : i32
    return %arg0, %c0_i32, %arg1 : i32, i32, i32
  }
}

</mosaic_0001>

<llo_original>
// kernel: tpu_custom_call.1
$region0: #{tpu_custom_call.1}
  #allocation0 [shape = 'u32[]', space=smem, size = 0x4, offset = 0x4, fixed_abs, tag = 'smem constant byte address 0x4 - core index']
  #allocation1 [shape = 'u32[72,128]{1,0:T(1,128)}', space=vmem, size = 0x9000, scoped, tag = 'internal scratch']
  #allocation2 [shape = 'f32[1,1]{1,0:T(1,128)S(6)}', space=smem, size = 0x200, scoped, tag = 'scoped memory for tpu_custom_call.1']
  %s0 = inlined_call_operand.vmem [shape: f32[1,8,256], index: 0, kind: input, shape index: {}]
  %s1 = inlined_call_operand.vmem [shape: f32[32,8], index: 1, kind: input, shape index: {}]
  %s2 = inlined_call_operand.vmem [shape: f32[32,1], index: 2, kind: input, shape index: {}]
  %s3 = inlined_call_operand.vmem [shape: f32[32,1], index: 3, kind: input, shape index: {}]
  %s4 = inlined_call_operand.<no memory space> [shape: f32[1,1], index: 4, kind: input, shape index: {}]
  %s5 = inlined_call_operand.hbm [shape: f32[1,2,256], index: 5, kind: output, shape index: {}]
  %s6 = sld [smem:[#allocation0]]
  $region30: #{tpu_custom_call.1} parent=0
    _
  %s8 = ssub.s32 1, %s6
  %s9 = scalar_select 0, %s8, %s6
  %10 = sst [smem:[#allocation2]] %s4
  $region1: #{tpu_custom_call.1} parent=0
    #allocation3 [shape = 'u8[2048]{0}', space=vmem, size = 0x800, scoped, tag = 'output window, operand 0, single buffered']
    #allocation4 [shape = 's32[1]{0}', space=sflag, size = 0x4, scoped, tag = 'scoped memory for tpu_custom_call.1']
    %11 = vsyncpa [#allocation4], 0
    // Predicated region
    $region2: #{tpu_custom_call.1} parent=1 // pred_check
      _
    $region3: #{tpu_custom_call.1} parent=1 // pred_check_branch
      %13 = sbr.rel (0) target = $region5
    $region4: #{tpu_custom_call.1} parent=1 // pred_region
      _
    $region5: #{tpu_custom_call.1} parent=1 // pred_fallthru
      _
    // Predicated region
    $region6: #{tpu_custom_call.1} parent=1 // pred_check
      _
    $region7: #{tpu_custom_call.1} parent=1 // pred_check_branch
      %15 = sbr.rel (0) target = $region9
    $region8: #{tpu_custom_call.1} parent=1 // pred_region
      _
    $region9: #{tpu_custom_call.1} parent=1 // pred_fallthru
      _
    // Predicated region
    $region10: #{tpu_custom_call.1} parent=1 // pred_check
      _
    $region11: #{tpu_custom_call.1} parent=1 // pred_check_branch
      %17 = sbr.rel (0) target = $region13
    $region12: #{tpu_custom_call.1} parent=1 // pred_region
      _
    $region13: #{tpu_custom_call.1} parent=1 // pred_fallthru
      _
    // Predicated region
    $region14: #{tpu_custom_call.1} parent=1 // pred_check
      _
    $region15: #{tpu_custom_call.1} parent=1 // pred_check_branch
      %19 = sbr.rel (0) target = $region17
    $region16: #{tpu_custom_call.1} parent=1 // pred_region
      _
    $region17: #{tpu_custom_call.1} parent=1 // pred_fallthru
      _
    // Predicated region
    $region18: #{tpu_custom_call.1} parent=1 // pred_check
      _
    $region19: #{tpu_custom_call.1} parent=1 // pred_check_branch
      %21 = sbr.rel (0) target = $region21
    $region20: #{tpu_custom_call.1} parent=1 // pred_region
      _
    $region21: #{tpu_custom_call.1} parent=1 // pred_fallthru
      _
    %v22 = vld [vmem:[%s1] sm:$0xff]
    %v23 = vld [vmem:[%s1 + $0x8] sm:$0xff]
    %v24 = vld [vmem:[%s1 + $0x10] sm:$0xff]
    %v25 = vld [vmem:[%s1 + $0x18] sm:$0xff]
    %v26 = vld [vmem:[%s2] sm:$0xff]
    %v27 = vld [vmem:[%s2 + $0x8] sm:$0xff]
    %v28 = vld [vmem:[%s2 + $0x10] sm:$0xff]
    %v29 = vld [vmem:[%s2 + $0x18] sm:$0xff]
    %v30 = vld [vmem:[%s3] sm:$0xff]
    %v31 = vld [vmem:[%s3 + $0x8] sm:$0xff]
    %v32 = vld [vmem:[%s3 + $0x10] sm:$0xff]
    %v33 = vld [vmem:[%s3 + $0x18] sm:$0xff]
    %s34 = sld [smem:[#allocation2]]
    %v35 = vld [vmem:[%s0] sm:$0xff]
    %v36 = vld [vmem:[%s0 + $0x8] sm:$0xff]
    %38 = vset.pattern.permute.xlu0 0
    %39 = vperm.xlu0 %38, %v26
    %v40 = vpop.permute.xlu0 %39
    %43 = vset.pattern.permute.xlu0 0
    %44 = vperm.xlu0 %43, %v27
    %v45 = vpop.permute.xlu0 %44
    %48 = vset.pattern.permute.xlu0 0
    %49 = vperm.xlu0 %48, %v28
    %v50 = vpop.permute.xlu0 %49
    %53 = vset.pattern.permute.xlu0 0
    %54 = vperm.xlu0 %53, %v29
    %v55 = vpop.permute.xlu0 %54
    %vm57 = vcmask 64512
    %v59 = vsel %vm57, %v22, 0
    %v62 = vsel %vm57, %v23, 0
    %v65 = vsel %vm57, %v24, 0
    %v68 = vsel %vm57, %v25, 0
    %70 = vmatpush.msra.mxu0 0.0
    %71 = vmatpush.msra.mxu0 0.0
    %72 = vmatpush.msra.mxu0 0.0
    %73 = vmatpush.msra.mxu0 0.0
    %74 = vmatpush.msra.mxu0 0.0
    %75 = vmatpush.msra.mxu0 0.0
    %76 = vmatpush.msra.mxu0 0.0
    %77 = vmatpush.msra.mxu0 0.0
    %78 = vmatpush.msra.mxu0 0.0
    %79 = vmatpush.msra.mxu0 0.0
    %80 = vmatpush.msra.mxu0 0.0
    %81 = vmatpush.msra.mxu0 0.0
    %82 = vmatpush.msra.mxu0 0.0
    %83 = vmatpush.msra.mxu0 0.0
    %84 = vmatpush.msra.mxu0 0.0
    %85 = vmatpush.msra.mxu0 %v35
    %86 = vmatmul.f32.gmra.mxu0 %v59
    %v87 = vpop.f32.mrf.mxu0
    %v88 = vadd.f32 %v40, %v87
    %89 = vmatmul.f32.gmra.mxu0 %v62
    %v90 = vpop.f32.mrf.mxu0
    %v91 = vadd.f32 %v45, %v90
    %92 = vmatmul.f32.gmra.mxu0 %v65
    %v93 = vpop.f32.mrf.mxu0
    %v94 = vadd.f32 %v50, %v93
    %95 = vmatmul.f32.gmra.mxu0 %v68
    %v96 = vpop.f32.mrf.mxu0
    %v97 = vadd.f32 %v55, %v96
    %98 = vdwg.mxu0
    %99 = vmatpush.msra.mxu0 0.0
    %100 = vmatpush.msra.mxu0 0.0
    %101 = vmatpush.msra.mxu0 0.0
    %102 = vmatpush.msra.mxu0 0.0
    %103 = vmatpush.msra.mxu0 0.0
    %104 = vmatpush.msra.mxu0 0.0
    %105 = vmatpush.msra.mxu0 0.0
    %106 = vmatpush.msra.mxu0 0.0
    %107 = vmatpush.msra.mxu0 0.0
    %108 = vmatpush.msra.mxu0 0.0
    %109 = vmatpush.msra.mxu0 0.0
    %110 = vmatpush.msra.mxu0 0.0
    %111 = vmatpush.msra.mxu0 0.0
    %112 = vmatpush.msra.mxu0 0.0
    %113 = vmatpush.msra.mxu0 0.0
    %114 = vmatpush.msra.mxu0 %v36
    %115 = vmatmul.f32.gmra.mxu0 %v59
    %v116 = vpop.f32.mrf.mxu0
    %v117 = vadd.f32 %v40, %v116
    %118 = vmatmul.f32.gmra.mxu0 %v62
    %v119 = vpop.f32.mrf.mxu0
    %v120 = vadd.f32 %v45, %v119
    %121 = vmatmul.f32.gmra.mxu0 %v65
    %v122 = vpop.f32.mrf.mxu0
    %v123 = vadd.f32 %v50, %v122
    %124 = vmatmul.f32.gmra.mxu0 %v68
    %v125 = vpop.f32.mrf.mxu0
    %v126 = vadd.f32 %v55, %v125
    %127 = vdwg.mxu0
    %v128 = vmax.f32 %v88, 0.0
    %v129 = vmax.f32 %v117, 0.0
    %v130 = vmax.f32 %v91, 0.0
    %v131 = vmax.f32 %v120, 0.0
    %v132 = vmax.f32 %v94, 0.0
    %v133 = vmax.f32 %v123, 0.0
    %v134 = vmax.f32 %v97, 0.0
    %v135 = vmax.f32 %v126, 0.0
    %137 = vset.pattern.permute.xlu0 0
    %138 = vperm.xlu0 %137, %v30
    %v139 = vpop.permute.xlu0 %138
    %142 = vset.pattern.permute.xlu0 0
    %143 = vperm.xlu0 %142, %v31
    %v144 = vpop.permute.xlu0 %143
    %147 = vset.pattern.permute.xlu0 0
    %148 = vperm.xlu0 %147, %v32
    %v149 = vpop.permute.xlu0 %148
    %152 = vset.pattern.permute.xlu0 0
    %153 = vperm.xlu0 %152, %v33
    %v154 = vpop.permute.xlu0 %153
    %v156 = vmul.f32 %v139, %v128
    %v157 = vmul.f32 %v139, %v129
    %v158 = vmul.f32 %v144, %v130
    %v159 = vmul.f32 %v144, %v131
    %v160 = vmul.f32 %v149, %v132
    %v161 = vmul.f32 %v149, %v133
    %v162 = vmul.f32 %v154, %v134
    %v163 = vmul.f32 %v154, %v135
    %v164 = vadd.f32 %v156, %v158
    %v165 = vrot.slane %v164, 4
    %v166 = vadd.f32 %v164, %v165
    %v167 = vrot.slane %v166, 2
    %v168 = vadd.f32 %v166, %v167
    %v169 = vrot.slane %v168, 1
    %v170 = vadd.f32 %v168, %v169
    %v171 = vadd.f32 %v157, %v159
    %v172 = vrot.slane %v171, 4
    %v173 = vadd.f32 %v171, %v172
    %v174 = vrot.slane %v173, 2
    %v175 = vadd.f32 %v173, %v174
    %v176 = vrot.slane %v175, 1
    %v177 = vadd.f32 %v175, %v176
    %v178 = vadd.f32 %v160, %v162
    %v179 = vrot.slane %v178, 4
    %v180 = vadd.f32 %v178, %v179
    %v181 = vrot.slane %v180, 2
    %v182 = vadd.f32 %v180, %v181
    %v183 = vrot.slane %v182, 1
    %v184 = vadd.f32 %v182, %v183
    %v185 = vadd.f32 %v161, %v163
    %v186 = vrot.slane %v185, 4
    %v187 = vadd.f32 %v185, %v186
    %v188 = vrot.slane %v187, 2
    %v189 = vadd.f32 %v187, %v188
    %v190 = vrot.slane %v189, 1
    %v191 = vadd.f32 %v189, %v190
    %v192 = vstv %s34
    %v193 = vadd.f32 %v170, %v192
    %v194 = vadd.f32 %v177, %v192
    %v195 = vadd.f32 %v184, %v192
    %v196 = vadd.f32 %v191, %v192
    %v197 = vxor.u32 %v193, 2147483648
    %v198 = vxor.u32 %v194, 2147483648
    %v199 = vxor.u32 %v195, 2147483648
    %v200 = vxor.u32 %v196, 2147483648
    %v201 = vmul.f32 %v197, 1.442695
    %v202 = vpow.pop %v201
    %v203 = vmul.f32 %v198, 1.442695
    %v204 = vpow.pop %v203
    %v205 = vmul.f32 %v199, 1.442695
    %v206 = vpow.pop %v205
    %v207 = vmul.f32 %v200, 1.442695
    %v208 = vpow.pop %v207
    %v209 = vadd.f32 %v202, 1.0
    %v210 = vadd.f32 %v204, 1.0
    %v211 = vadd.f32 %v206, 1.0
    %v212 = vadd.f32 %v208, 1.0
    %v213 = vrcp.pop %v209
    %v214 = vmul.f32 %v209, %v213
    %v215 = vsub.f32 1.0, %v214
    %v216 = vmul.f32 %v213, %v215
    %v217 = vadd.f32 %v213, %v216
    %vm218 = vweird.f32 %v209
    %vm219 = vweird.f32 %v213
    %vm220 = vmor %vm218, %vm219
    %v221 = vsel %vm220, %v213, %v217
    %v222 = vand.u32 2147483647, %v209
    %vm223 = vcmp.eq.f32.partialorder %v222, 8.507059e+37
    %v224 = vand.u32 %v209, 2147483648
    %v225 = vor.u32 1.1754944e-38, %v224
    %v226 = vsel %vm223, %v225, %v221
    %v227 = vmul.f32 1.0, %v226
    %v228 = vrcp.pop %v210
    %v229 = vmul.f32 %v210, %v228
    %v230 = vsub.f32 1.0, %v229
    %v231 = vmul.f32 %v228, %v230
    %v232 = vadd.f32 %v228, %v231
    %vm233 = vweird.f32 %v210
    %vm234 = vweird.f32 %v228
    %vm235 = vmor %vm233, %vm234
    %v236 = vsel %vm235, %v228, %v232
    %v237 = vand.u32 2147483647, %v210
    %vm238 = vcmp.eq.f32.partialorder %v237, 8.507059e+37
    %v239 = vand.u32 %v210, 2147483648
    %v240 = vor.u32 1.1754944e-38, %v239
    %v241 = vsel %vm238, %v240, %v236
    %v242 = vmul.f32 1.0, %v241
    %v243 = vrcp.pop %v211
    %v244 = vmul.f32 %v211, %v243
    %v245 = vsub.f32 1.0, %v244
    %v246 = vmul.f32 %v243, %v245
    %v247 = vadd.f32 %v243, %v246
    %vm248 = vweird.f32 %v211
    %vm249 = vweird.f32 %v243
    %vm250 = vmor %vm248, %vm249
    %v251 = vsel %vm250, %v243, %v247
    %v252 = vand.u32 2147483647, %v211
    %vm253 = vcmp.eq.f32.partialorder %v252, 8.507059e+37
    %v254 = vand.u32 %v211, 2147483648
    %v255 = vor.u32 1.1754944e-38, %v254
    %v256 = vsel %vm253, %v255, %v251
    %v257 = vmul.f32 1.0, %v256
    %v258 = vrcp.pop %v212
    %v259 = vmul.f32 %v212, %v258
    %v260 = vsub.f32 1.0, %v259
    %v261 = vmul.f32 %v258, %v260
    %v262 = vadd.f32 %v258, %v261
    %vm263 = vweird.f32 %v212
    %vm264 = vweird.f32 %v258
    %vm265 = vmor %vm263, %vm264
    %v266 = vsel %vm265, %v258, %v262
    %v267 = vand.u32 2147483647, %v212
    %vm268 = vcmp.eq.f32.partialorder %v267, 8.507059e+37
    %v269 = vand.u32 %v212, 2147483648
    %v270 = vor.u32 1.1754944e-38, %v269
    %v271 = vsel %vm268, %v270, %v266
    %v272 = vmul.f32 1.0, %v271
    %v277 = vrot.slane %v242, 6
    %v278 = vrot.slane %v272, 6
    %vm279 = vcmask 1041408
    %v280 = vsel %vm279, %v227, %v277
    %v281 = vsel %vm279, %v257, %v278
    %vm282 = vcmask 1044484
    %v283 = vsel %vm282, %v280, %v280
    %vm284 = vcmask 1046534
    %v285 = vsel %vm284, %v280, %v283
    %v286 = vrot.slane %v281, 7
    %vm287 = vcmask 1041409
    %v288 = vsel %vm287, %v286, %v285
    %vm289 = vcmask 1043459
    %v290 = vsel %vm289, %v286, %v288
    %vm291 = vcmask 1045509
    %v292 = vsel %vm291, %v286, %v290
    %vm293 = vcmask 1047559
    %v294 = vsel %vm293, %v286, %v292
    %296 = vst [vmem:[#allocation3] sm:$0xf] %v294
    // Predicated region
    $region22: #{tpu_custom_call.1} parent=1 // pred_check
      _
    $region23: #{tpu_custom_call.1} parent=1 // pred_check_branch
      %298 = sbr.rel (0) target = $region25
    $region24: #{tpu_custom_call.1} parent=1 // pred_region
      %300 = vsyncadd [#allocation4], 0
      %s302 = sshll.u32 [#allocation3], 4
      %s303 = int_to_ptr.vmem [resolvable:$true] %s302
      %s304 = sshll.u32 %s5, 4
      %s305 = int_to_ptr.hbm [resolvable:$true] %s304
      %307 = dma.vmem_to_hbm [thread:$0]  %s303, 64, %s305, [#allocation4]
    $region25: #{tpu_custom_call.1} parent=1 // pred_fallthru
      _
    // Predicated region
    $region26: #{tpu_custom_call.1} parent=1 // pred_check
      _
    $region27: #{tpu_custom_call.1} parent=1 // pred_check_branch
      %309 = sbr.rel (0) target = $region29
    $region28: #{tpu_custom_call.1} parent=1 // pred_region
      %311 = dma.done [#allocation4], 64
    $region29: #{tpu_custom_call.1} parent=1 // pred_fallthru
      _
    %312 = vsyncpa [#allocation4], 1

</llo_original>
